<compile_context>
chip_gen: v7x
topology: tpu7x:2x2x1
jax: 0.10.0
libtpu: 0.0.40
codegen_flags: <defaults>
</compile_context>

<pallas_src>
import functools

import jax
import jax.numpy as jnp
from jax import lax
from jax.experimental import pallas as pl
from jax.experimental.pallas import tpu as pltpu


def _group_norm_kernel(x_ref, w_ref, b_ref, o_ref, *, eps, cg, single_pass):
    # x_ref : (1, R, HW)  -- gpb groups' channels packed densely on sublanes.
    # w_ref : (C, 1)      -- fully resident per-channel scale (f32 column).
    # b_ref : (C, 1)      -- fully resident per-channel bias  (f32 column).
    # o_ref : (1, R, HW)
    _, R, hw = x_ref.shape
    gpb = R // cg
    inv_n = 1.0 / float(cg * hw)

    x = x_ref[0]                                                    # (R, HW)

    # Group-membership matrices: p[g, i] == pt[i, g] == 1 iff channel-row i of
    # this block belongs to its group g (built from iotas, no vector int div).
    row_i = lax.broadcasted_iota(jnp.int32, (gpb, R), 1)
    grp_lo = lax.broadcasted_iota(jnp.int32, (gpb, R), 0) * cg
    p = ((row_i >= grp_lo) & (row_i < grp_lo + cg)).astype(jnp.float32)
    row_it = lax.broadcasted_iota(jnp.int32, (R, gpb), 0)
    grp_lot = lax.broadcasted_iota(jnp.int32, (R, gpb), 1) * cg
    pt = ((row_it >= grp_lot) & (row_it < grp_lot + cg)).astype(jnp.float32)

    def per_row_group_sum(col):  # (R, 1) -> (R, 1): group total broadcast to its rows
        grp = jnp.dot(p, col, preferred_element_type=jnp.float32)      # (gpb, 1)
        return jnp.dot(pt, grp, preferred_element_type=jnp.float32)    # (R, 1)

    # Mean (f32 accumulation; the cast stays fused inside the reduction).
    row_sum = jnp.sum(x, axis=-1, keepdims=True, dtype=jnp.float32)    # (R, 1)
    mean_r = per_row_group_sum(row_sum) * inv_n                        # (R, 1)

    if single_pass:
        # Optional E[x^2] - mean^2 form (one fewer traversal, slightly worse
        # numerics) -- flag-gated per review.
        row_sq = jnp.sum(jnp.square(x.astype(jnp.float32)),
                         axis=-1, keepdims=True)
        var_r = jnp.maximum(
            per_row_group_sum(row_sq) * inv_n - jnp.square(mean_r), 0.0)
    else:
        # Centered two-pass variance; (x - mean)^2 is recomputed inside the
        # reduction so no standalone f32 block temporary is bound.
        row_sq = jnp.sum(jnp.square(x.astype(jnp.float32) - mean_r),
                         axis=-1, keepdims=True)
        var_r = per_row_group_sum(row_sq) * inv_n
    rstd_r = lax.rsqrt(var_r + eps)                                    # (R, 1)

    # Per-channel affine folded into ONE fused output pass: y = x*scale + shift.
    row0 = pl.multiple_of(pl.program_id(1) * R, 8)  # true: R%8==0 unless GB==1 (then 0)
    w = w_ref[pl.ds(row0, R), :]                                       # (R, 1)
    b = b_ref[pl.ds(row0, R), :]
    scale = rstd_r * w
    shift = b - mean_r * scale
    o_ref[0] = (x.astype(jnp.float32) * scale + shift).astype(o_ref.dtype)


def _tpu_config():
    """Returns (target_block_bytes, vmem_cap_bytes, min_grid_steps, x_buffers)."""
    try:
        kind = jax.devices()[0].device_kind.lower()
    except Exception:
        kind = ""
    if "v7" in kind:       # 64 MiB VMEM, 2 TensorCores -> small blocks, many steps
        return 4 << 20, 56 << 20, 8, 2
    if "v6" in kind:       # 128 MiB VMEM, 1 TensorCore -> bigger blocks
        return 12 << 20, 100 << 20, 2, 2
    if "v5" in kind and ("lite" in kind or "5e" in kind):  # v5e: slowest HBM
        return 8 << 20, 100 << 20, 2, 3
    if "v5" in kind or "v4" in kind:                        # v5p / v4
        return 12 << 20, 100 << 20, 4, 2
    return 4 << 20, 48 << 20, 4, 2  # unknown: conservative (v7x-like)


def _select_groups_per_block(G, Cg, N, HW, itemsize, *, sublane, target_bytes,
                             min_steps, max_rows=1024):
    """Pick groups-per-block: packed row count must be a sublane multiple (or the
    whole channel dim), the block should fit the per-generation size target, the
    membership matrices stay small, and the grid keeps >= min_steps steps."""
    C = G * Cg
    per_group = Cg * HW * itemsize
    valid = [g for g in range(1, G + 1)
             if G % g == 0 and ((g * Cg) % sublane == 0 or g * Cg == C)]
    # g == G is always valid (R == C), so `valid` is never empty.
    small = [g for g in valid if g * Cg <= max_rows] or [min(valid)]
    fitting = [g for g in small if g * per_group <= target_bytes] or [min(small)]
    stepped = [g for g in fitting if N * (G // g) >= min_steps]
    return max(stepped) if stepped else min(fitting)


def _group_norm_xla(x, weight, bias, num_groups, eps):
    # Correctness fallback for groups too large for VMEM on this generation.
    N, C, H, W = x.shape
    xg = x.reshape(N, num_groups, -1).astype(jnp.float32)
    mean = jnp.mean(xg, axis=-1, keepdims=True)
    var = jnp.mean(jnp.square(xg - mean), axis=-1, keepdims=True)
    xhat = ((xg - mean) * lax.rsqrt(var + eps)).reshape(N, C, H, W)
    return (xhat * weight.astype(jnp.float32)[None, :, None, None]
            + bias.astype(jnp.float32)[None, :, None, None]).astype(x.dtype)


def group_norm(x, weight, bias, *, num_groups, eps=1e-5, single_pass_stats=False):
    """GroupNorm forward. x: (N, C, H, W); weight/bias: (C,)."""
    N, C, H, W = x.shape
    G = int(num_groups)
    if G < 1 or C % G != 0:
        raise ValueError(f"num_groups={G} must divide num_channels={C}")
    Cg = C // G
    HW = H * W
    itemsize = jnp.dtype(x.dtype).itemsize
    sublane = max(8, 32 // itemsize)  # f32: 8, bf16: 16, int8/fp8: 32

    target_bytes, vmem_cap, min_steps, x_buffers = _tpu_config()
    gpb = _select_groups_per_block(G, Cg, N, HW, itemsize, sublane=sublane,
                                   target_bytes=target_bytes, min_steps=min_steps)
    R = gpb * Cg
    GB = G // gpb

    # Honest VMEM estimate: pipelined in/out blocks at native width, ~2 f32
    # traversal temporaries, membership matrices, resident params, slack.
    block_bytes = R * HW * itemsize
    param_bytes = 2 * 2 * (-(-C // 8) * 8) * 128 * 4
    vmem_need = ((x_buffers + 2) * block_bytes + 2 * R * HW * 4
                 + 2 * R * gpb * 4 + param_bytes + (2 << 20))
    if vmem_need > vmem_cap:
        # TODO(synk): spatially-tiled two-pass Pallas path instead of XLA here.
        return _group_norm_xla(x, weight, bias, G, eps)
    vmem_limit = int(min(max(vmem_need, 32 << 20), vmem_cap))

    x3 = x.reshape(N, C, HW)                          # free, contiguous reshape
    w_col = weight.astype(jnp.float32).reshape(C, 1)  # column layout: broadcasts
    b_col = bias.astype(jnp.float32).reshape(C, 1)    # against (R, HW) rows

    x_spec_kwargs = {}
    if x_buffers != 2 and N * GB >= 2 * x_buffers:
        # Deeper input pipelining on v5e -- only when the grid is long enough.
        x_spec_kwargs = dict(pipeline_mode=pl.Buffered(x_buffers))

    kernel = functools.partial(_group_norm_kernel, eps=float(eps), cg=Cg,
                               single_pass=single_pass_stats)

    out = pl.pallas_call(
        kernel,
        out_shape=jax.ShapeDtypeStruct((N, C, HW), x.dtype),
        grid=(N, GB),
        in_specs=[
            pl.BlockSpec((1, R, HW), lambda n, g: (n, g, 0), **x_spec_kwargs),
            # Params: whole array, constant index_map -> stays VMEM-resident.
            pl.BlockSpec((C, 1), lambda n, g: (0, 0)),
            pl.BlockSpec((C, 1), lambda n, g: (0, 0)),
        ],
        out_specs=pl.BlockSpec((1, R, HW), lambda n, g: (n, g, 0)),
        compiler_params=pltpu.CompilerParams(
            dimension_semantics=("parallel", "parallel"),
            vmem_limit_bytes=vmem_limit),
    )(x3, w_col, b_col)

    return out.reshape(N, C, H, W)


class GroupNormPallas:
    """Mirrors the PyTorch GroupNorm module's __init__ / forward semantics."""

    def __init__(self, num_channels, num_groups=32, min_channels_per_group=4,
                 eps=1e-5, key=None):
        g = max(1, min(num_groups, num_channels // min_channels_per_group))
        # F.group_norm requires num_groups | num_channels; clamp to the nearest
        # valid grouping instead of erroring (PyTorch would raise here).
        while num_channels % g:
            g -= 1
        self.num_groups = g
        self.eps = eps
        if key is None:
            # Module defaults: weight = ones, bias = zeros.
            self.weight = jnp.ones((num_channels,), jnp.float32)
            self.bias = jnp.zeros((num_channels,), jnp.float32)
        else:
            kw, kb = jax.random.split(key)
            self.weight = jax.random.normal(kw, (num_channels,), jnp.float32)
            self.bias = jax.random.normal(kb, (num_channels,), jnp.float32)

    def __call__(self, x, N_views_xa=1):
        # Params stay float32; the kernel accumulates in f32 and casts the
        # result back to x.dtype (no lossy param truncation for bf16 inputs).
        return group_norm(x, self.weight, self.bias,
                          num_groups=self.num_groups, eps=self.eps)


def _group_norm_ref(x, weight, bias, num_groups, eps):
    N, C, H, W = x.shape
    G = num_groups
    xg = x.reshape(N, G, C // G, H, W).astype(jnp.float32)
    mean = xg.mean(axis=(2, 3, 4), keepdims=True)
    var = ((xg - mean) ** 2).mean(axis=(2, 3, 4), keepdims=True)
    xhat = ((xg - mean) / jnp.sqrt(var + eps)).reshape(N, C, H, W)
    return (xhat * weight[None, :, None, None].astype(jnp.float32)
            + bias[None, :, None, None].astype(jnp.float32)).astype(x.dtype)


if __name__ == "__main__":
    key = jax.random.PRNGKey(0)
    kx, kp = jax.random.split(key)

    N, C, H, W = 2, 16, 16, 16  # num_groups = min(32, 16 // 4) = 4, Cg = 4
    x = jax.random.normal(kx, (N, C, H, W), jnp.float32)

    gn = GroupNormPallas(num_channels=C, key=kp)

    # float32 path
    out = jax.block_until_ready(gn(x))
    ref = _group_norm_ref(x, gn.weight, gn.bias, gn.num_groups, gn.eps)
    assert out.shape == (N, C, H, W)
    assert jnp.allclose(out, ref, atol=1e-4, rtol=1e-4), float(
        jnp.max(jnp.abs(out - ref)))

    # bfloat16 path exercises the no-eager-f32-copy / packed-sublane handling.
    xb = x.astype(jnp.bfloat16)
    outb = jax.block_until_ready(gn(xb))
    refb = _group_norm_ref(xb, gn.weight, gn.bias, gn.num_groups, gn.eps)
    assert outb.dtype == jnp.bfloat16
    assert jnp.allclose(outb.astype(jnp.float32), refb.astype(jnp.float32),
                        atol=5e-2, rtol=5e-2)

    print("KERNEL_OK")
</pallas_src>

<mosaic_0001>
module attributes {stable_mosaic.version = 11 : i64} {
  func.func @_group_norm_kernel(%arg0: i32, %arg1: i32, %arg2: memref<1x8x256xf32, #tpu.memory_space<vmem>>, %arg3: memref<16x1xf32, #tpu.memory_space<vmem>>, %arg4: memref<16x1xf32, #tpu.memory_space<vmem>>, %arg5: memref<1x8x256xf32, #tpu.memory_space<vmem>>) attributes {dimension_semantics = [#tpu.dimension_semantics<parallel>, #tpu.dimension_semantics<parallel>], iteration_bounds = array<i64: 2, 2>, scalar_prefetch = 0 : i64, scratch_operands = 0 : i64, tpu.core_type = #tpu.core_type<tc>, window_params = [{transform_indices = @transform_0, window_bounds = array<i64: 1, 8, 256>}, {pipeline_mode = #tpu.pipeline_mode<synchronous>, transform_indices = @transform_1, window_bounds = array<i64: 16, 1>}, {pipeline_mode = #tpu.pipeline_mode<synchronous>, transform_indices = @transform_2, window_bounds = array<i64: 16, 1>}, {transform_indices = @transform_3, window_bounds = array<i64: 1, 8, 256>}]} {
    %c0 = arith.constant 0 : index
    %c0_0 = arith.constant 0 : index
    %c0_1 = arith.constant 0 : index
    %0 = vector.load %arg2[%c0, %c0_0, %c0_1] : memref<1x8x256xf32, #tpu.memory_space<vmem>>, vector<1x8x256xf32>
    %1 = vector.shape_cast %0 : vector<1x8x256xf32> to vector<8x256xf32>
    %2 = tpu.iota {dimensions = array<i32: 1>} : vector<2x8xi32>
    %3 = tpu.iota {dimensions = array<i32: 0>} : vector<2x8xi32>
    %c4_i32 = arith.constant 4 : i32
    %4 = vector.broadcast %c4_i32 : i32 to vector<2x8xi32>
    %5 = arith.muli %3, %4 : vector<2x8xi32>
    %6 = arith.cmpi sge, %2, %5 : vector<2x8xi32>
    %c4_i32_2 = arith.constant 4 : i32
    %7 = vector.broadcast %c4_i32_2 : i32 to vector<2x8xi32>
    %8 = arith.addi %5, %7 : vector<2x8xi32>
    %9 = arith.cmpi slt, %2, %8 : vector<2x8xi32>
    %10 = arith.andi %6, %9 : vector<2x8xi1>
    %11 = arith.extui %10 : vector<2x8xi1> to vector<2x8xi32>
    %12 = arith.sitofp %11 : vector<2x8xi32> to vector<2x8xf32>
    %13 = tpu.iota {dimensions = array<i32: 0>} : vector<8x2xi32>
    %14 = tpu.iota {dimensions = array<i32: 1>} : vector<8x2xi32>
    %c4_i32_3 = arith.constant 4 : i32
    %15 = vector.broadcast %c4_i32_3 : i32 to vector<8x2xi32>
    %16 = arith.muli %14, %15 : vector<8x2xi32>
    %17 = arith.cmpi sge, %13, %16 : vector<8x2xi32>
    %c4_i32_4 = arith.constant 4 : i32
    %18 = vector.broadcast %c4_i32_4 : i32 to vector<8x2xi32>
    %19 = arith.addi %16, %18 : vector<8x2xi32>
    %20 = arith.cmpi slt, %13, %19 : vector<8x2xi32>
    %21 = arith.andi %17, %20 : vector<8x2xi1>
    %22 = arith.extui %21 : vector<8x2xi1> to vector<8x2xi32>
    %23 = arith.sitofp %22 : vector<8x2xi32> to vector<8x2xf32>
    %cst = arith.constant dense<0.000000e+00> : vector<8xf32>
    %24 = vector.multi_reduction <add>, %1, %cst [1] : vector<8x256xf32> to vector<8xf32>
    %25 = vector.shape_cast %24 : vector<8xf32> to vector<8x1xf32>
    %cst_5 = arith.constant dense<0.000000e+00> : vector<2x1xf32>
    %26 = tpu.matmul %12, %25, %cst_5 {dimension_numbers = #tpu.dot_dimension_numbers<[1], [0], [0], [1], [0, 0, 1, 1], [], []>} : vector<2x8xf32>, vector<8x1xf32>, vector<2x1xf32> -> vector<2x1xf32>
    %cst_6 = arith.constant dense<0.000000e+00> : vector<8x1xf32>
    %27 = tpu.matmul %23, %26, %cst_6 {dimension_numbers = #tpu.dot_dimension_numbers<[1], [0], [0], [1], [0, 0, 1, 1], [], []>} : vector<8x2xf32>, vector<2x1xf32>, vector<8x1xf32> -> vector<8x1xf32>
    %cst_7 = arith.constant 9.765625E-4 : f32
    %28 = vector.broadcast %cst_7 : f32 to vector<8x1xf32>
    %29 = arith.mulf %27, %28 : vector<8x1xf32>
    %30 = vector.broadcast %29 : vector<8x1xf32> to vector<8x256xf32>
    %31 = arith.subf %1, %30 : vector<8x256xf32>
    %32 = arith.mulf %31, %31 : vector<8x256xf32>
    %cst_8 = arith.constant dense<0.000000e+00> : vector<8xf32>
    %33 = vector.multi_reduction <add>, %32, %cst_8 [1] : vector<8x256xf32> to vector<8xf32>
    %34 = vector.shape_cast %33 : vector<8xf32> to vector<8x1xf32>
    %cst_9 = arith.constant dense<0.000000e+00> : vector<2x1xf32>
    %35 = tpu.matmul %12, %34, %cst_9 {dimension_numbers = #tpu.dot_dimension_numbers<[1], [0], [0], [1], [0, 0, 1, 1], [], []>} : vector<2x8xf32>, vector<8x1xf32>, vector<2x1xf32> -> vector<2x1xf32>
    %cst_10 = arith.constant dense<0.000000e+00> : vector<8x1xf32>
    %36 = tpu.matmul %23, %35, %cst_10 {dimension_numbers = #tpu.dot_dimension_numbers<[1], [0], [0], [1], [0, 0, 1, 1], [], []>} : vector<8x2xf32>, vector<2x1xf32>, vector<8x1xf32> -> vector<8x1xf32>
    %cst_11 = arith.constant 9.765625E-4 : f32
    %37 = vector.broadcast %cst_11 : f32 to vector<8x1xf32>
    %38 = arith.mulf %36, %37 : vector<8x1xf32>
    %cst_12 = arith.constant 9.99999974E-6 : f32
    %39 = vector.broadcast %cst_12 : f32 to vector<8x1xf32>
    %40 = arith.addf %38, %39 : vector<8x1xf32>
    %41 = math.rsqrt %40 : vector<8x1xf32>
    %c8_i32 = arith.constant 8 : i32
    %42 = arith.muli %arg1, %c8_i32 : i32
    %43 = tpu.assume_multiple %42, 8 : i32
    %44 = arith.index_cast %43 : i32 to index
    %c0_13 = arith.constant 0 : index
    %45 = vector.load %arg3[%44, %c0_13] : memref<16x1xf32, #tpu.memory_space<vmem>>, vector<8x1xf32>
    %46 = arith.index_cast %43 : i32 to index
    %c0_14 = arith.constant 0 : index
    %47 = vector.load %arg4[%46, %c0_14] : memref<16x1xf32, #tpu.memory_space<vmem>>, vector<8x1xf32>
    %48 = arith.mulf %41, %45 : vector<8x1xf32>
    %49 = arith.mulf %29, %48 : vector<8x1xf32>
    %50 = arith.subf %47, %49 : vector<8x1xf32>
    %51 = vector.broadcast %48 : vector<8x1xf32> to vector<8x256xf32>
    %52 = arith.mulf %1, %51 : vector<8x256xf32>
    %53 = vector.broadcast %50 : vector<8x1xf32> to vector<8x256xf32>
    %54 = arith.addf %52, %53 : vector<8x256xf32>
    %c0_15 = arith.constant 0 : index
    %c0_16 = arith.constant 0 : index
    %c0_17 = arith.constant 0 : index
    %55 = vector.load %arg5[%c0_15, %c0_16, %c0_17] : memref<1x8x256xf32, #tpu.memory_space<vmem>>, vector<1x8x256xf32>
    %56 = vector.shape_cast %55 : vector<1x8x256xf32> to vector<8x256xf32>
    %57 = vector.shape_cast %54 : vector<8x256xf32> to vector<1x8x256xf32>
    tpu.vector_store %arg5[%c0_15, %c0_16, %c0_17], %57 {strides = array<i32>} : memref<1x8x256xf32, #tpu.memory_space<vmem>>, vector<1x8x256xf32>,
    return
  }
  func.func @transform_0(%arg0: i32, %arg1: i32) -> (i32, i32, i32) {
    %c0_i32 = arith.constant 0 : i32
    %c0_i32_0 = arith.constant 0 : i32
    return %arg0, %arg1, %c0_i32 : i32, i32, i32
  }
  func.func @transform_1(%arg0: i32, %arg1: i32) -> (i32, i32) {
    %c0_i32 = arith.constant 0 : i32
    %c0_i32_0 = arith.constant 0 : i32
    %c0_i32_1 = arith.constant 0 : i32
    return %c0_i32, %c0_i32_0 : i32, i32
  }
  func.func @transform_2(%arg0: i32, %arg1: i32) -> (i32, i32) {
    %c0_i32 = arith.constant 0 : i32
    %c0_i32_0 = arith.constant 0 : i32
    %c0_i32_1 = arith.constant 0 : i32
    return %c0_i32, %c0_i32_0 : i32, i32
  }
  func.func @transform_3(%arg0: i32, %arg1: i32) -> (i32, i32, i32) {
    %c0_i32 = arith.constant 0 : i32
    %c0_i32_0 = arith.constant 0 : i32
    return %arg0, %arg1, %c0_i32 : i32, i32, i32
  }
}

</mosaic_0001>

<llo_original>
// kernel: tpu_custom_call.1
$region0: #{tpu_custom_call.1}
  #allocation0 [shape = 'u32[]', space=smem, size = 0x4, offset = 0x4, fixed_abs, tag = 'smem constant byte address 0x4 - core index']
  #allocation1 [shape = 'u32[144,128]{1,0:T(1,128)}', space=vmem, size = 0x12000, scoped, tag = 'internal scratch']
  %s0 = inlined_call_operand.hbm [shape: f32[2,16,256], index: 0, kind: input, shape index: {}]
  %s1 = inlined_call_operand.vmem [shape: f32[16,1], index: 1, kind: input, shape index: {}]
  %s2 = inlined_call_operand.vmem [shape: f32[16,1], index: 2, kind: input, shape index: {}]
  %s3 = inlined_call_operand.hbm [shape: f32[2,16,256], index: 3, kind: output, shape index: {}]
  %s4 = sld [smem:[#allocation0]]
  $region49: #{tpu_custom_call.1} parent=0
    _
  %s6 = ssub.s32 1, %s4
  %s7 = scalar_select 0, %s6, %s4
  $region1: #{tpu_custom_call.1} parent=0
    #allocation2 [shape = 'u8[16384]{0}', space=vmem, size = 0x4000, scoped, tag = 'input window, operand 0']
    #allocation3 [shape = 's32[2]{0}', space=sflag, size = 0x8, scoped, tag = 'scoped memory for tpu_custom_call.1']
    #allocation4 [shape = 's32[2]{0}', space=sflag, size = 0x8, scoped, tag = 'scoped memory for tpu_custom_call.1']
    #allocation5 [shape = 'u8[16384]{0}', space=vmem, size = 0x4000, scoped, tag = 'output window, operand 0']
    %8 = vsyncpa [#allocation3], 0
    %s9 = scalar_lea.sflag [#allocation3], 1
    %10 = vsyncpa %s9, 0
    %11 = vsyncpa [#allocation4], 0
    %s12 = scalar_lea.sflag [#allocation4], 1
    %13 = vsyncpa %s12, 0
    loop: start=0, step=1, limit=6
    $region2: #{tpu_custom_call.1} parent=1 // loop_pre_header
      _
    $region3: #{tpu_custom_call.1} parent=1 // loop_header
      %s15 = sphi 0, %s19
      %p16 = scmp.ge.s32.totalorder %s15, 6
      %s22 = sphi 0, %s34
      %s23 = sphi 0, %s30
      %s24 = sphi 0, %s22
      %s25 = sphi 0, %s23
      %s26 = sphi 0, %s24
      %s27 = sphi 0, %s25
      %s39 = sphi 0, %s41
      %s42 = sphi 0, %s39
      %s43 = sphi 0, %s42
      %s59 = sphi 0, %s43
      %s63 = sphi 0, %s63
      %s65 = sphi 0, %s63
      %s66 = sphi 0, %s65
      %s80 = sphi 0, %s66
      %s84 = sphi 0, %s84
      %s86 = sphi 0, %s84
      %s87 = sphi 0, %s86
      %s101 = sphi 0, %s87
      %s109 = sphi 0, %s111
      %s112 = sphi 0, %s109
      %s113 = sphi 0, %s112
      %s129 = sphi 0, %s113
    $region4: #{tpu_custom_call.1} parent=1 // loop_header_branch
      %18 = sbr.rel (%p16) target = $region8
    $region5: #{tpu_custom_call.1} parent=1 // loop_body
      %s20 = ssub.s32 %s15, 1
      %s21 = ssub.s32 %s15, 2
      %s28 = sadd.s32 1, %s23
      %p29 = scmp.ge.s32.totalorder %s28, 2
      %s30 = scalar_select %p29, 0, %s28
      %s31 = sadd.s32 1, %s22
      %s32 = scalar_select %p29, %s31, %s22
      %p33 = scmp.ge.s32.totalorder %s32, 2
      %s34 = scalar_select %p33, 0, %s32
      %s35 = ssub.s32 %s22, %s34
      %s36 = ssub.s32 %s23, %s30
      %s37 = sor.u32 %s35, %s36
      %p38 = scmp.eq.s32.totalorder %s37, 0
      %s40 = sadd.s32 %s39, 1
      %s41 = scalar_select %p38, %s39, %s40
      %p44 = pneg %p38
      %p45 = scmp.eq.s32.totalorder %s15, 3
      %p46 = por %p44, %p45
      %p47 = scmp.ne.s32.totalorder %s39, %s42
      %p48 = scmp.eq.s32.totalorder %s15, 0
      %p49 = por %p47, %p48
      %p50 = scmp.ne.s32.totalorder %s39, %s42
      %p51 = scmp.eq.s32.totalorder %s20, 3
      %p52 = por %p50, %p51
      %p53 = scmp.ne.s32.totalorder %s42, %s43
      %p54 = scmp.eq.s32.totalorder %s20, 0
      %p55 = por %p53, %p54
      %p56 = scmp.ne.s32.totalorder %s42, %s43
      %p57 = scmp.eq.s32.totalorder %s21, 3
      %p58 = por %p56, %p57
      %p60 = scmp.ne.s32.totalorder %s43, %s59
      %p61 = scmp.eq.s32.totalorder %s21, 0
      %p62 = por %p60, %p61
      %s64 = sadd.s32 %s63, 1
      %p67 = scmp.eq.s32.totalorder %s15, 3
      %p68 = scmp.ne.s32.totalorder %s63, %s65
      %p69 = scmp.eq.s32.totalorder %s15, 0
      %p70 = por %p68, %p69
      %p71 = scmp.ne.s32.totalorder %s63, %s65
      %p72 = scmp.eq.s32.totalorder %s20, 3
      %p73 = por %p71, %p72
      %p74 = scmp.ne.s32.totalorder %s65, %s66
      %p75 = scmp.eq.s32.totalorder %s20, 0
      %p76 = por %p74, %p75
      %p77 = scmp.ne.s32.totalorder %s65, %s66
      %p78 = scmp.eq.s32.totalorder %s21, 3
      %p79 = por %p77, %p78
      %p81 = scmp.ne.s32.totalorder %s66, %s80
      %p82 = scmp.eq.s32.totalorder %s21, 0
      %p83 = por %p81, %p82
      %s85 = sadd.s32 %s84, 1
      %p88 = scmp.eq.s32.totalorder %s15, 3
      %p89 = scmp.ne.s32.totalorder %s84, %s86
      %p90 = scmp.eq.s32.totalorder %s15, 0
      %p91 = por %p89, %p90
      %p92 = scmp.ne.s32.totalorder %s84, %s86
      %p93 = scmp.eq.s32.totalorder %s20, 3
      %p94 = por %p92, %p93
      %p95 = scmp.ne.s32.totalorder %s86, %s87
      %p96 = scmp.eq.s32.totalorder %s20, 0
      %p97 = por %p95, %p96
      %p98 = scmp.ne.s32.totalorder %s86, %s87
      %p99 = scmp.eq.s32.totalorder %s21, 3
      %p100 = por %p98, %p99
      %p102 = scmp.ne.s32.totalorder %s87, %s101
      %p103 = scmp.eq.s32.totalorder %s21, 0
      %p104 = por %p102, %p103
      %s105 = ssub.s32 %s22, %s34
      %s106 = ssub.s32 %s23, %s30
      %s107 = sor.u32 %s105, %s106
      %p108 = scmp.eq.s32.totalorder %s107, 0
      %s110 = sadd.s32 %s109, 1
      %s111 = scalar_select %p108, %s109, %s110
      %p114 = pneg %p108
      %p115 = scmp.eq.s32.totalorder %s15, 3
      %p116 = por %p114, %p115
      %p117 = scmp.ne.s32.totalorder %s109, %s112
      %p118 = scmp.eq.s32.totalorder %s15, 0
      %p119 = por %p117, %p118
      %p120 = scmp.ne.s32.totalorder %s109, %s112
      %p121 = scmp.eq.s32.totalorder %s20, 3
      %p122 = por %p120, %p121
      %p123 = scmp.ne.s32.totalorder %s112, %s113
      %p124 = scmp.eq.s32.totalorder %s20, 0
      %p125 = por %p123, %p124
      %p126 = scmp.ne.s32.totalorder %s112, %s113
      %p127 = scmp.eq.s32.totalorder %s21, 3
      %p128 = por %p126, %p127
      %p130 = scmp.ne.s32.totalorder %s113, %s129
      %p131 = scmp.eq.s32.totalorder %s21, 0
      %p132 = por %p130, %p131
      %p133 = scmp.le.s32.totalorder 1, %s15
      %p134 = scmp.lt.s32.totalorder %s15, 5
      %p135 = pnand %p133, %p134
      %p136 = pneg %p135
      // Predicated region
      $region9: #{tpu_custom_call.1} parent=5 // pred_check
        _
      $region10: #{tpu_custom_call.1} parent=5 // pred_check_branch
        %138 = sbr.rel (%p135) target = $region12
      $region11: #{tpu_custom_call.1} parent=5 // pred_region
        %s139 = ssub.s32 %s15, 1
        // Predicated region
        $region13: #{tpu_custom_call.1} parent=11 // pred_check
          %p140 = pneg %p76
        $region14: #{tpu_custom_call.1} parent=11 // pred_check_branch
          %142 = sbr.rel (%p140) target = $region16
        $region15: #{tpu_custom_call.1} parent=11 // pred_region
          _
        $region16: #{tpu_custom_call.1} parent=11 // pred_fallthru
          _
        // Predicated region
        $region17: #{tpu_custom_call.1} parent=11 // pred_check
          %p143 = pneg %p97
        $region18: #{tpu_custom_call.1} parent=11 // pred_check_branch
          %145 = sbr.rel (%p143) target = $region20
        $region19: #{tpu_custom_call.1} parent=11 // pred_region
          _
        $region20: #{tpu_custom_call.1} parent=11 // pred_fallthru
          _
      $region12: #{tpu_custom_call.1} parent=5 // pred_fallthru
        _
      %p146 = scmp.lt.s32.totalorder %s15, 4
      // Predicated region
      $region21: #{tpu_custom_call.1} parent=5 // pred_check
        %p147 = pneg %p146
      $region22: #{tpu_custom_call.1} parent=5 // pred_check_branch
        %149 = sbr.rel (%p147) target = $region24
      $region23: #{tpu_custom_call.1} parent=5 // pred_region
        // Predicated region
        $region25: #{tpu_custom_call.1} parent=23 // pred_check
          %p150 = pneg %p49
        $region26: #{tpu_custom_call.1} parent=23 // pred_check_branch
          %152 = sbr.rel (%p150) target = $region28
        $region27: #{tpu_custom_call.1} parent=23 // pred_region
          %s153 = sand.u32 %s39, 1
          %s154 = scalar_lea.sflag [#allocation3], %s153
          %s155 = sand.u32 %s39, 1
          %s156 = smul.addr %s155, 16
          %s157 = scalar_lea.vmem [#allocation2], %s156
          %s159 = ssub.s32 256, 256
          %160 = vsyncadd %s154, %s159
          %s161 = smul.addr %s23, 2
          %s162 = smul.addr %s22, 4
          %s163 = sadd.s32 %s161, %s162
          %s164 = smul.addr %s163, 128
          %s165 = scalar_lea.hbm %s0, %s164
          %s167 = sshll.u32 %s157, 4
          %s168 = int_to_ptr.vmem [resolvable:$true] %s167
          %170 = dma.hbm_to_vmem [thread:$0]  %s165, 256, %s168, %s154
        $region28: #{tpu_custom_call.1} parent=23 // pred_fallthru
          _
      $region24: #{tpu_custom_call.1} parent=5 // pred_fallthru
        _
      %p171 = scmp.le.s32.totalorder 1, %s15
      %p172 = scmp.lt.s32.totalorder %s15, 5
      %p173 = pnand %p171, %p172
      %p174 = pneg %p173
      // Predicated region
      $region29: #{tpu_custom_call.1} parent=5 // pred_check
        _
      $region30: #{tpu_custom_call.1} parent=5 // pred_check_branch
        %176 = sbr.rel (%p173) target = $region32
      $region31: #{tpu_custom_call.1} parent=5 // pred_region
        %s177 = ssub.s32 %s15, 1
        %s178 = sand.u32 %s42, 1
        %s179 = scalar_lea.sflag [#allocation3], %s178
        %s180 = sand.u32 %s42, 1
        %s181 = smul.addr %s180, 16
        %s182 = scalar_lea.vmem [#allocation2], %s181
        // Predicated region
        $region33: #{tpu_custom_call.1} parent=31 // pred_check
          %p183 = pneg %p55
        $region34: #{tpu_custom_call.1} parent=31 // pred_check_branch
          %185 = sbr.rel (%p183) target = $region36
        $region35: #{tpu_custom_call.1} parent=31 // pred_region
          %186 = dma.done %s179, 256
        $region36: #{tpu_custom_call.1} parent=31 // pred_fallthru
          _
        %s187 = sand.u32 %s42, 1
        %s188 = scalar_lea.sflag [#allocation3], %s187
        %s189 = sand.u32 %s42, 1
        %s190 = smul.addr %s189, 16
        %s191 = scalar_lea.vmem [#allocation2], %s190
        %p192 = pneg %p55
        %p193 = pneg %p52
        %p194 = pneg %p76
        %p195 = pneg %p73
        %p196 = pneg %p97
        %p197 = pneg %p94
        %p198 = pneg %p125
        %p199 = pneg %p122
        %s200 = sand.u32 %s112, 1
        %s201 = scalar_lea.sflag [#allocation4], %s200
        %s202 = sand.u32 %s112, 1
        %s203 = smul.addr %s202, 16
        %s204 = scalar_lea.vmem [#allocation5], %s203
        %v205 = vld [vmem:[%s182] sm:$0xff]
        %v206 = vld [vmem:[%s182 + $0x8] sm:$0xff]
        %v207 = vlaneseq
        %v208 = vand.u32 %v207, 127
        %v209 = vlaneseq
        %v210 = vshrl.u32 %v209, 7
        %v211 = vmul.u32 %v210, 4
        %vm212 = vcmp.ge.s32.totalorder %v208, %v211
        %v213 = vadd.s32 %v211, 4
        %vm214 = vcmp.lt.s32.totalorder %v208, %v213
        %vm215 = vmand %vm212, %vm214
        %v216 = vsel %vm215, 1, 0
        %v217 = vcvt.s32.f32 %v216
        %v218 = vmul.u32 %v208, 4
        %vm219 = vcmp.ge.s32.totalorder %v210, %v218
        %v220 = vadd.s32 %v218, 4
        %vm221 = vcmp.lt.s32.totalorder %v210, %v220
        %vm222 = vmand %vm219, %vm221
        %v223 = vsel %vm222, 1, 0
        %v224 = vcvt.s32.f32 %v223
        %v225 = vadd.f32 %v205, %v206
        %226 = vadd.xlane.f32.xlu0 %v225
        %v227 = vpop.xlane.xlu0 %226
        %vm228 = vcmask 64512
        %v230 = vsel %vm228, %v217, 0
        %232 = vmatprep.subr.mxu0 0.0
        %233 = vmatpush1.msra.mxu0 %v227
        %234 = vmatprep.subr.mxu0 0.0
        %235 = vmatpush1.msra.mxu0 0.0
        %236 = vmatprep.subr.mxu0 0.0
        %237 = vmatpush1.msra.mxu0 0.0
        %238 = vmatprep.subr.mxu0 0.0
        %239 = vmatpush1.msra.mxu0 0.0
        %240 = vmatprep.subr.mxu0 0.0
        %241 = vmatpush1.msra.mxu0 0.0
        %242 = vmatprep.subr.mxu0 0.0
        %243 = vmatpush1.msra.mxu0 0.0
        %244 = vmatprep.subr.mxu0 0.0
        %245 = vmatpush1.msra.mxu0 0.0
        %246 = vmatprep.subr.mxu0 0.0
        %247 = vmatpush1.msra.mxu0 0.0
        %248 = vmatprep.subr.mxu0 0.0
        %249 = vmatpush1.msra.mxu0 0.0
        %250 = vmatprep.subr.mxu0 0.0
        %251 = vmatpush1.msra.mxu0 0.0
        %252 = vmatprep.subr.mxu0 0.0
        %253 = vmatpush1.msra.mxu0 0.0
        %254 = vmatprep.subr.mxu0 0.0
        %255 = vmatpush1.msra.mxu0 0.0
        %256 = vmatprep.subr.mxu0 0.0
        %257 = vmatpush1.msra.mxu0 0.0
        %258 = vmatprep.subr.mxu0 0.0
        %259 = vmatpush1.msra.mxu0 0.0
        %260 = vmatprep.subr.mxu0 0.0
        %261 = vmatpush1.msra.mxu0 0.0
        %262 = vmatprep.subr.mxu0 0.0
        %263 = vmatpush1.msra.mxu0 0.0
        %264 = vmatprep.subr.mxu0 0.0
        %265 = vmatpush1.msra.mxu0 0.0
        %266 = vmatprep.subr.mxu0 0.0
        %267 = vmatpush1.msra.mxu0 0.0
        %268 = vmatprep.subr.mxu0 0.0
        %269 = vmatpush1.msra.mxu0 0.0
        %270 = vmatprep.subr.mxu0 0.0
        %271 = vmatpush1.msra.mxu0 0.0
        %272 = vmatprep.subr.mxu0 0.0
        %273 = vmatpush1.msra.mxu0 0.0
        %274 = vmatprep.subr.mxu0 0.0
        %275 = vmatpush1.msra.mxu0 0.0
        %276 = vmatprep.subr.mxu0 0.0
        %277 = vmatpush1.msra.mxu0 0.0
        %278 = vmatprep.subr.mxu0 0.0
        %279 = vmatpush1.msra.mxu0 0.0
        %280 = vmatprep.subr.mxu0 0.0
        %281 = vmatpush1.msra.mxu0 0.0
        %282 = vmatprep.subr.mxu0 0.0
        %283 = vmatpush1.msra.mxu0 0.0
        %284 = vmatprep.subr.mxu0 0.0
        %285 = vmatpush1.msra.mxu0 0.0
        %286 = vmatprep.subr.mxu0 0.0
        %287 = vmatpush1.msra.mxu0 0.0
        %288 = vmatprep.subr.mxu0 0.0
        %289 = vmatpush1.msra.mxu0 0.0
        %290 = vmatprep.subr.mxu0 0.0
        %291 = vmatpush1.msra.mxu0 0.0
        %292 = vmatprep.subr.mxu0 0.0
        %293 = vmatpush1.msra.mxu0 0.0
        %294 = vmatprep.subr.mxu0 0.0
        %295 = vmatpush1.msra.mxu0 0.0
        %296 = vmatprep.mubr.f32.mxu0 0.0
        %297 = vmatmul.mubr.f32.gmra.mrb[0].mxu0 %v230
        %v298 = vpop.f32.mrb[0].mxu0
        %v299 = vadd.f32 0.0, %v298
        %v300 = vpop.f32.mrb[0].mxu0
        %301 = vdwg.mxu0
        %vm302 = vcmask 15360
        %v304 = vsel %vm302, %v224, 0
        %vm306 = vcmask 1041408
        %v308 = vsel %vm306, %v299, 0
        %310 = vmatprep.subr.mxu0 0.0
        %311 = vmatpush1.msra.mxu0 %v308
        %312 = vmatprep.subr.mxu0 0.0
        %313 = vmatpush1.msra.mxu0 0.0
        %314 = vmatprep.subr.mxu0 0.0
        %315 = vmatpush1.msra.mxu0 0.0
        %316 = vmatprep.subr.mxu0 0.0
        %317 = vmatpush1.msra.mxu0 0.0
        %318 = vmatprep.subr.mxu0 0.0
        %319 = vmatpush1.msra.mxu0 0.0
        %320 = vmatprep.subr.mxu0 0.0
        %321 = vmatpush1.msra.mxu0 0.0
        %322 = vmatprep.subr.mxu0 0.0
        %323 = vmatpush1.msra.mxu0 0.0
        %324 = vmatprep.subr.mxu0 0.0
        %325 = vmatpush1.msra.mxu0 0.0
        %326 = vmatprep.subr.mxu0 0.0
        %327 = vmatpush1.msra.mxu0 0.0
        %328 = vmatprep.subr.mxu0 0.0
        %329 = vmatpush1.msra.mxu0 0.0
        %330 = vmatprep.subr.mxu0 0.0
        %331 = vmatpush1.msra.mxu0 0.0
        %332 = vmatprep.subr.mxu0 0.0
        %333 = vmatpush1.msra.mxu0 0.0
        %334 = vmatprep.subr.mxu0 0.0
        %335 = vmatpush1.msra.mxu0 0.0
        %336 = vmatprep.subr.mxu0 0.0
        %337 = vmatpush1.msra.mxu0 0.0
        %338 = vmatprep.subr.mxu0 0.0
        %339 = vmatpush1.msra.mxu0 0.0
        %340 = vmatprep.subr.mxu0 0.0
        %341 = vmatpush1.msra.mxu0 0.0
        %342 = vmatprep.subr.mxu0 0.0
        %343 = vmatpush1.msra.mxu0 0.0
        %344 = vmatprep.subr.mxu0 0.0
        %345 = vmatpush1.msra.mxu0 0.0
        %346 = vmatprep.subr.mxu0 0.0
        %347 = vmatpush1.msra.mxu0 0.0
        %348 = vmatprep.subr.mxu0 0.0
        %349 = vmatpush1.msra.mxu0 0.0
        %350 = vmatprep.subr.mxu0 0.0
        %351 = vmatpush1.msra.mxu0 0.0
        %352 = vmatprep.subr.mxu0 0.0
        %353 = vmatpush1.msra.mxu0 0.0
        %354 = vmatprep.subr.mxu0 0.0
        %355 = vmatpush1.msra.mxu0 0.0
        %356 = vmatprep.subr.mxu0 0.0
        %357 = vmatpush1.msra.mxu0 0.0
        %358 = vmatprep.subr.mxu0 0.0
        %359 = vmatpush1.msra.mxu0 0.0
        %360 = vmatprep.subr.mxu0 0.0
        %361 = vmatpush1.msra.mxu0 0.0
        %362 = vmatprep.subr.mxu0 0.0
        %363 = vmatpush1.msra.mxu0 0.0
        %364 = vmatprep.subr.mxu0 0.0
        %365 = vmatpush1.msra.mxu0 0.0
        %366 = vmatprep.subr.mxu0 0.0
        %367 = vmatpush1.msra.mxu0 0.0
        %368 = vmatprep.subr.mxu0 0.0
        %369 = vmatpush1.msra.mxu0 0.0
        %370 = vmatprep.subr.mxu0 0.0
        %371 = vmatpush1.msra.mxu0 0.0
        %372 = vmatprep.subr.mxu0 0.0
        %373 = vmatpush1.msra.mxu0 0.0
        %374 = vmatprep.mubr.f32.mxu0 0.0
        %375 = vmatmul.mubr.f32.gmra.mrb[0].mxu0 %v304
        %v376 = vpop.f32.mrb[0].mxu0
        %v377 = vadd.f32 0.0, %v376
        %v378 = vpop.f32.mrb[0].mxu0
        %379 = vdwg.mxu0
        %v380 = vmul.f32 %v377, 0.0009765625
        %382 = vset.pattern.permute.xlu0 0
        %383 = vperm.xlu0 %382, %v380
        %v384 = vpop.permute.xlu0 %383
        %v386 = vsub.f32 %v205, %v384
        %v387 = vsub.f32 %v206, %v384
        %v388 = vmul.f32 %v386, %v386
        %v389 = vmul.f32 %v387, %v387
        %v390 = vadd.f32 %v388, %v389
        %391 = vadd.xlane.f32.xlu0 %v390
        %v392 = vpop.xlane.xlu0 %391
        %393 = vmatprep.subr.mxu0 0.0
        %394 = vmatpush1.msra.mxu0 %v392
        %395 = vmatprep.subr.mxu0 0.0
        %396 = vmatpush1.msra.mxu0 0.0
        %397 = vmatprep.subr.mxu0 0.0
        %398 = vmatpush1.msra.mxu0 0.0
        %399 = vmatprep.subr.mxu0 0.0
        %400 = vmatpush1.msra.mxu0 0.0
        %401 = vmatprep.subr.mxu0 0.0
        %402 = vmatpush1.msra.mxu0 0.0
        %403 = vmatprep.subr.mxu0 0.0
        %404 = vmatpush1.msra.mxu0 0.0
        %405 = vmatprep.subr.mxu0 0.0
        %406 = vmatpush1.msra.mxu0 0.0
        %407 = vmatprep.subr.mxu0 0.0
        %408 = vmatpush1.msra.mxu0 0.0
        %409 = vmatprep.subr.mxu0 0.0
        %410 = vmatpush1.msra.mxu0 0.0
        %411 = vmatprep.subr.mxu0 0.0
        %412 = vmatpush1.msra.mxu0 0.0
        %413 = vmatprep.subr.mxu0 0.0
        %414 = vmatpush1.msra.mxu0 0.0
        %415 = vmatprep.subr.mxu0 0.0
        %416 = vmatpush1.msra.mxu0 0.0
        %417 = vmatprep.subr.mxu0 0.0
        %418 = vmatpush1.msra.mxu0 0.0
        %419 = vmatprep.subr.mxu0 0.0
        %420 = vmatpush1.msra.mxu0 0.0
        %421 = vmatprep.subr.mxu0 0.0
        %422 = vmatpush1.msra.mxu0 0.0
        %423 = vmatprep.subr.mxu0 0.0
        %424 = vmatpush1.msra.mxu0 0.0
        %425 = vmatprep.subr.mxu0 0.0
        %426 = vmatpush1.msra.mxu0 0.0
        %427 = vmatprep.subr.mxu0 0.0
        %428 = vmatpush1.msra.mxu0 0.0
        %429 = vmatprep.subr.mxu0 0.0
        %430 = vmatpush1.msra.mxu0 0.0
        %431 = vmatprep.subr.mxu0 0.0
        %432 = vmatpush1.msra.mxu0 0.0
        %433 = vmatprep.subr.mxu0 0.0
        %434 = vmatpush1.msra.mxu0 0.0
        %435 = vmatprep.subr.mxu0 0.0
        %436 = vmatpush1.msra.mxu0 0.0
        %437 = vmatprep.subr.mxu0 0.0
        %438 = vmatpush1.msra.mxu0 0.0
        %439 = vmatprep.subr.mxu0 0.0
        %440 = vmatpush1.msra.mxu0 0.0
        %441 = vmatprep.subr.mxu0 0.0
        %442 = vmatpush1.msra.mxu0 0.0
        %443 = vmatprep.subr.mxu0 0.0
        %444 = vmatpush1.msra.mxu0 0.0
        %445 = vmatprep.subr.mxu0 0.0
        %446 = vmatpush1.msra.mxu0 0.0
        %447 = vmatprep.subr.mxu0 0.0
        %448 = vmatpush1.msra.mxu0 0.0
        %449 = vmatprep.subr.mxu0 0.0
        %450 = vmatpush1.msra.mxu0 0.0
        %451 = vmatprep.subr.mxu0 0.0
        %452 = vmatpush1.msra.mxu0 0.0
        %453 = vmatprep.subr.mxu0 0.0
        %454 = vmatpush1.msra.mxu0 0.0
        %455 = vmatprep.subr.mxu0 0.0
        %456 = vmatpush1.msra.mxu0 0.0
        %457 = vmatprep.mubr.f32.mxu0 0.0
        %458 = vmatmul.mubr.f32.gmra.mrb[0].mxu0 %v230
        %v459 = vpop.f32.mrb[0].mxu0
        %v460 = vadd.f32 0.0, %v459
        %v461 = vpop.f32.mrb[0].mxu0
        %462 = vdwg.mxu0
        %v464 = vsel %vm306, %v460, 0
        %466 = vmatprep.subr.mxu0 0.0
        %467 = vmatpush1.msra.mxu0 %v464
        %468 = vmatprep.subr.mxu0 0.0
        %469 = vmatpush1.msra.mxu0 0.0
        %470 = vmatprep.subr.mxu0 0.0
        %471 = vmatpush1.msra.mxu0 0.0
        %472 = vmatprep.subr.mxu0 0.0
        %473 = vmatpush1.msra.mxu0 0.0
        %474 = vmatprep.subr.mxu0 0.0
        %475 = vmatpush1.msra.mxu0 0.0
        %476 = vmatprep.subr.mxu0 0.0
        %477 = vmatpush1.msra.mxu0 0.0
        %478 = vmatprep.subr.mxu0 0.0
        %479 = vmatpush1.msra.mxu0 0.0
        %480 = vmatprep.subr.mxu0 0.0
        %481 = vmatpush1.msra.mxu0 0.0
        %482 = vmatprep.subr.mxu0 0.0
        %483 = vmatpush1.msra.mxu0 0.0
        %484 = vmatprep.subr.mxu0 0.0
        %485 = vmatpush1.msra.mxu0 0.0
        %486 = vmatprep.subr.mxu0 0.0
        %487 = vmatpush1.msra.mxu0 0.0
        %488 = vmatprep.subr.mxu0 0.0
        %489 = vmatpush1.msra.mxu0 0.0
        %490 = vmatprep.subr.mxu0 0.0
        %491 = vmatpush1.msra.mxu0 0.0
        %492 = vmatprep.subr.mxu0 0.0
        %493 = vmatpush1.msra.mxu0 0.0
        %494 = vmatprep.subr.mxu0 0.0
        %495 = vmatpush1.msra.mxu0 0.0
        %496 = vmatprep.subr.mxu0 0.0
        %497 = vmatpush1.msra.mxu0 0.0
        %498 = vmatprep.subr.mxu0 0.0
        %499 = vmatpush1.msra.mxu0 0.0
        %500 = vmatprep.subr.mxu0 0.0
        %501 = vmatpush1.msra.mxu0 0.0
        %502 = vmatprep.subr.mxu0 0.0
        %503 = vmatpush1.msra.mxu0 0.0
        %504 = vmatprep.subr.mxu0 0.0
        %505 = vmatpush1.msra.mxu0 0.0
        %506 = vmatprep.subr.mxu0 0.0
        %507 = vmatpush1.msra.mxu0 0.0
        %508 = vmatprep.subr.mxu0 0.0
        %509 = vmatpush1.msra.mxu0 0.0
        %510 = vmatprep.subr.mxu0 0.0
        %511 = vmatpush1.msra.mxu0 0.0
        %512 = vmatprep.subr.mxu0 0.0
        %513 = vmatpush1.msra.mxu0 0.0
        %514 = vmatprep.subr.mxu0 0.0
        %515 = vmatpush1.msra.mxu0 0.0
        %516 = vmatprep.subr.mxu0 0.0
        %517 = vmatpush1.msra.mxu0 0.0
        %518 = vmatprep.subr.mxu0 0.0
        %519 = vmatpush1.msra.mxu0 0.0
        %520 = vmatprep.subr.mxu0 0.0
        %521 = vmatpush1.msra.mxu0 0.0
        %522 = vmatprep.subr.mxu0 0.0
        %523 = vmatpush1.msra.mxu0 0.0
        %524 = vmatprep.subr.mxu0 0.0
        %525 = vmatpush1.msra.mxu0 0.0
        %526 = vmatprep.subr.mxu0 0.0
        %527 = vmatpush1.msra.mxu0 0.0
        %528 = vmatprep.subr.mxu0 0.0
        %529 = vmatpush1.msra.mxu0 0.0
        %530 = vmatprep.mubr.f32.mxu0 0.0
        %531 = vmatmul.mubr.f32.gmra.mrb[0].mxu0 %v304
        %v532 = vpop.f32.mrb[0].mxu0
        %v533 = vadd.f32 0.0, %v532
        %v534 = vpop.f32.mrb[0].mxu0
        %535 = vdwg.mxu0
        %v536 = vmul.f32 %v533, 0.0009765625
        %v537 = vadd.f32 %v536, 1e-05
        %v538 = vrsqrt.pop %v537
        %s539 = smul.u32 %s25, 8
        %s540 = scalar_lea.vmem %s1, %s539
        %v541 = vld [vmem:[%s540] sm:$0xff]
        %s542 = scalar_lea.vmem %s2, %s539
        %v543 = vld [vmem:[%s542] sm:$0xff]
        %v544 = vmul.f32 %v538, %v541
        %v545 = vmul.f32 %v380, %v544
        %v546 = vsub.f32 %v543, %v545
        %548 = vset.pattern.permute.xlu0 0
        %549 = vperm.xlu0 %548, %v544
        %v550 = vpop.permute.xlu0 %549
        %v552 = vmul.f32 %v205, %v550
        %v553 = vmul.f32 %v206, %v550
        %555 = vset.pattern.permute.xlu0 0
        %556 = vperm.xlu0 %555, %v546
        %v557 = vpop.permute.xlu0 %556
        %v559 = vadd.f32 %v552, %v557
        %v560 = vadd.f32 %v553, %v557
        %561 = vst [vmem:[%s204] sm:$0xff] %v559
        %562 = vst [vmem:[%s204 + $0x8] sm:$0xff] %v560
        %s563 = sand.u32 %s112, 1
        %s564 = scalar_lea.sflag [#allocation4], %s563
        %s565 = sand.u32 %s112, 1
        %s566 = smul.addr %s565, 16
        %s567 = scalar_lea.vmem [#allocation5], %s566
        // Predicated region
        $region37: #{tpu_custom_call.1} parent=31 // pred_check
          %p568 = pneg %p122
        $region38: #{tpu_custom_call.1} parent=31 // pred_check_branch
          %570 = sbr.rel (%p568) target = $region40
        $region39: #{tpu_custom_call.1} parent=31 // pred_region
          %s572 = ssub.s32 256, 256
          %573 = vsyncadd %s564, %s572
          %s574 = smul.addr %s25, 2
          %s575 = smul.addr %s24, 4
          %s576 = sadd.s32 %s574, %s575
          %s577 = smul.addr %s576, 128
          %s578 = scalar_lea.hbm %s3, %s577
          %s580 = sshll.u32 %s567, 4
          %s581 = int_to_ptr.vmem [resolvable:$true] %s580
          %583 = dma.vmem_to_hbm [thread:$0]  %s581, 256, %s578, %s564
        $region40: #{tpu_custom_call.1} parent=31 // pred_fallthru
          _
      $region32: #{tpu_custom_call.1} parent=5 // pred_fallthru
        _
      %p584 = scmp.le.s32.totalorder 2, %s15
      // Predicated region
      $region41: #{tpu_custom_call.1} parent=5 // pred_check
        %p585 = pneg %p584
      $region42: #{tpu_custom_call.1} parent=5 // pred_check_branch
        %587 = sbr.rel (%p585) target = $region44
      $region43: #{tpu_custom_call.1} parent=5 // pred_region
        %s588 = ssub.s32 %s15, 2
        // Predicated region
        $region45: #{tpu_custom_call.1} parent=43 // pred_check
          %p589 = pneg %p128
        $region46: #{tpu_custom_call.1} parent=43 // pred_check_branch
          %591 = sbr.rel (%p589) target = $region48
        $region47: #{tpu_custom_call.1} parent=43 // pred_region
          %s592 = sand.u32 %s113, 1
          %s593 = scalar_lea.sflag [#allocation4], %s592
          %s594 = sand.u32 %s113, 1
          %s595 = smul.addr %s594, 16
          %s596 = scalar_lea.vmem [#allocation5], %s595
          %597 = dma.done %s593, 256
        $region48: #{tpu_custom_call.1} parent=43 // pred_fallthru
          _
      $region44: #{tpu_custom_call.1} parent=5 // pred_fallthru
        _
    $region6: #{tpu_custom_call.1} parent=1 // loop_footer
      %s19 = sadd.s32 1, %s15
    $region7: #{tpu_custom_call.1} parent=1 // loop_footer_branch
      %14 = sbr.rel target = $region3
    $region8: #{tpu_custom_call.1} parent=1 // loop_exit
      _
    %598 = vsyncpa [#allocation3], 1
    %s599 = scalar_lea.sflag [#allocation3], 1
    %600 = vsyncpa %s599, 1
    %601 = vsyncpa [#allocation4], 1
    %s602 = scalar_lea.sflag [#allocation4], 1
    %603 = vsyncpa %s602, 1

</llo_original>
